<compile_context>
chip_gen: v7x
topology: tpu7x:2x2x1
jax: 0.10.0
libtpu: 0.0.40
codegen_flags: <defaults>
</compile_context>

<pallas_src>
import math

import jax
import jax.numpy as jnp
import numpy as np
from jax.experimental import pallas as pl
from jax.experimental.pallas import tpu as pltpu

SIGMA = 1.0
HARD_SIGMA = 10000.0
DIV = 0.001

LANE = 128
SUB = 8
BLOCK_ROWS = 1024  # (1024, 128) f32 block = 512 KiB; ~3 MiB total double-buffered


def gmm_quant_kernel(mean_ref, c_soft_ref, c_hard_ref, logc_ref,
                     x_ref, q_ref, sym_ref):
    """Per-element GMM soft/hard quantization.

    SMEM (L,) f32:
      mean_ref   : mean_l
      c_soft_ref : -SIGMA      / (2*(std_l^2 + div))
      c_hard_ref : -HARD_SIGMA / (2*(std_l^2 + div))
      logc_ref   : log( norm_pi_l / sqrt(2*pi*(std_l^2 + div)) )
    VMEM:
      x_ref   : (BLOCK_ROWS, LANE) f32 input block
      q_ref   : (BLOCK_ROWS, LANE) f32 quantized output
      sym_ref : (BLOCK_ROWS, LANE) i32 hard symbol (argmax index)
    """
    x = x_ref[...]
    L = mean_ref.shape[0]

    # Hoist every SMEM scalar read once (no repeated scalar loads/broadcasts).
    means = [mean_ref[l] for l in range(L)]
    c_soft = [c_soft_ref[l] for l in range(L)]
    c_hard = [c_hard_ref[l] for l in range(L)]
    logc = [logc_ref[l] for l in range(L)]

    # Squared distance to every mean.
    d2 = []
    for l in range(L):
        d = x - means[l]
        d2.append(d * d)

    # ---- soft path: weighted softmax with coef folded into the exponent.
    # s_l = -SIGMA * d2_l / (2*var_l) + log(coef_l)
    s_soft = [d2[l] * c_soft[l] + logc[l] for l in range(L)]
    m_soft = s_soft[0]
    for l in range(1, L):
        m_soft = jnp.maximum(m_soft, s_soft[l])

    num0 = jnp.exp(s_soft[0] - m_soft)
    den_soft = num0
    softout_num = num0 * means[0]
    for l in range(1, L):
        n = jnp.exp(s_soft[l] - m_soft)
        den_soft = den_soft + n
        softout_num = softout_num + n * means[l]
    # den_soft >= 1 (max term contributes exp(0)); approx reciprocal uses the
    # otherwise-idle EUP slot.  Forward value of q equals hardout anyway.
    softout = softout_num * pl.reciprocal(den_soft, approx=True)

    # ---- hard path: no exp needed.
    # argmax_l exp(-H*dist_l - m)*coef_l == argmax_l (c_hard_l*d2_l + logc_l)
    best = d2[0] * c_hard[0] + logc[0]
    best_idx = jnp.zeros_like(x, dtype=jnp.int32)
    hardout = jnp.full_like(x, means[0])
    for l in range(1, L):
        s = d2[l] * c_hard[l] + logc[l]
        upd = s > best                       # strict > -> first occurrence wins
        best = jnp.where(upd, s, best)
        best_idx = jnp.where(upd, jnp.int32(l), best_idx)
        hardout = jnp.where(upd, means[l], hardout)

    # Straight-through: value equals hardout, gradient path through softout.
    q_ref[...] = softout + jax.lax.stop_gradient(hardout - softout)
    sym_ref[...] = best_idx


def gmm_quantize(x_nchw, mean, log_std, log_pi, block_rows=BLOCK_ROWS):
    """Forward of GMMQuantizer. Returns (mid_tensor_q, symbols_hard)."""
    # ---- per-component constants (matches _get_norm_pi / _get_std)
    std = jnp.exp(log_std)
    mp = jnp.exp(log_pi - jnp.min(log_pi))
    norm_pi = mp / jnp.sum(mp)
    var = std * std + DIV
    inv2var = 1.0 / (2.0 * var)
    coef = norm_pi / jnp.sqrt(2.0 * math.pi * var)
    c_soft = (-SIGMA) * inv2var
    c_hard = (-HARD_SIGMA) * inv2var
    logc = jnp.log(coef)

    b, c, h, w = x_nchw.shape
    P = b * c * h * w

    # Adaptive block: large for big tensors, shrunk (multiple of 8 rows) for
    # small ones so we don't pad a tiny input up to 1024 rows.
    rows_needed = pl.cdiv(P, LANE)
    br = min(block_rows, pl.cdiv(rows_needed, SUB) * SUB)
    br = max(br, SUB)
    tile_elems = br * LANE
    n_blocks = pl.cdiv(P, tile_elems)
    Ppad = n_blocks * tile_elems
    pad = Ppad - P

    xf = x_nchw.reshape(-1).astype(jnp.float32)
    if pad:  # only materialize a padded copy when actually needed
        xf = jnp.concatenate([xf, jnp.zeros((pad,), jnp.float32)])
    R = Ppad // LANE
    x2 = xf.reshape(R, LANE)

    grid = (n_blocks,)
    smem_spec = pl.BlockSpec(memory_space=pltpu.SMEM)
    tile_spec = pl.BlockSpec((br, LANE), lambda i: (i, 0))

    q2, sym2 = pl.pallas_call(
        gmm_quant_kernel,
        out_shape=(
            jax.ShapeDtypeStruct((R, LANE), jnp.float32),
            jax.ShapeDtypeStruct((R, LANE), jnp.int32),
        ),
        grid=grid,
        in_specs=[smem_spec, smem_spec, smem_spec, smem_spec, tile_spec],
        out_specs=(tile_spec, tile_spec),
        compiler_params=pltpu.CompilerParams(
            dimension_semantics=("parallel",)),
    )(mean.astype(jnp.float32), c_soft.astype(jnp.float32),
      c_hard.astype(jnp.float32), logc.astype(jnp.float32), x2)

    qf = q2.reshape(-1)
    symf = sym2.reshape(-1)
    if pad:  # only slice (extra copy) when padding was added
        qf = qf[:P]
        symf = symf[:P]
    q = qf.reshape(b, c, h, w)
    sym = symf.reshape(b, c, h, w, 1)
    # TODO(synk): torch returns symbols_hard as int64; int32 used here (TPU-native).
    # TODO(synk): straight-through gradient needs a custom_vjp around pallas_call.
    return q, sym


def _reference(x, mean, log_std, log_pi):
    """Pure-JAX reference mirroring the PyTorch forward."""
    std = jnp.exp(log_std)
    mp = jnp.exp(log_pi - jnp.min(log_pi))
    norm_pi = mp / jnp.sum(mp)
    var = std * std + DIV

    d = x[..., None] - mean
    dist = (d * d) / 2.0 / var

    def wsoftmax(s):
        m = jnp.max(s, axis=4, keepdims=True)
        e = jnp.exp(s - m) / jnp.sqrt(2.0 * math.pi * var) * norm_pi
        return e / jnp.sum(e, axis=4, keepdims=True)

    phi_soft = wsoftmax(-SIGMA * dist)
    phi_hard = wsoftmax(-HARD_SIGMA * dist)
    sym = jnp.argmax(phi_hard, axis=4)[..., None]
    one_hot = jax.nn.one_hot(sym[..., 0], mean.shape[0], dtype=jnp.float32)
    softout = jnp.sum(phi_soft * mean, axis=4)
    hardout = jnp.sum(one_hot * mean, axis=4)
    return softout + (hardout - softout), sym


if __name__ == "__main__":
    # module params: num_of_mean=5, std_list / pi_list length 5, mean_list=None
    num_of_mean = 5
    mean = jnp.asarray(
        np.linspace(-(num_of_mean // 2), num_of_mean // 2, num_of_mean),
        dtype=jnp.float32)
    std_list = np.array([0.5, 0.6, 0.7, 0.6, 0.5], dtype=np.float32)
    pi_list = np.array([0.1, 0.2, 0.4, 0.2, 0.1], dtype=np.float32)
    log_std = jnp.log(jnp.asarray(std_list))
    log_pi = jnp.log(jnp.asarray(pi_list))

    key = jax.random.PRNGKey(0)
    x = jax.random.normal(key, (2, 4, 16, 16), dtype=jnp.float32) * 2.0

    q, sym = gmm_quantize(x, mean, log_std, log_pi)
    q = jax.block_until_ready(q)
    sym = jax.block_until_ready(sym)

    q_ref, sym_ref = _reference(x, mean, log_std, log_pi)
    assert q.shape == (2, 4, 16, 16) and sym.shape == (2, 4, 16, 16, 1)
    np.testing.assert_allclose(np.asarray(q), np.asarray(q_ref),
                               rtol=1e-5, atol=1e-5)
    np.testing.assert_array_equal(np.asarray(sym),
                                  np.asarray(sym_ref).astype(np.int32))
    print("KERNEL_OK")
</pallas_src>

<mosaic_0001>
module attributes {stable_mosaic.version = 11 : i64} {
  func.func @gmm_quant_kernel(%arg0: i32, %arg1: memref<5xf32, #tpu.memory_space<smem>>, %arg2: memref<5xf32, #tpu.memory_space<smem>>, %arg3: memref<5xf32, #tpu.memory_space<smem>>, %arg4: memref<5xf32, #tpu.memory_space<smem>>, %arg5: memref<16x128xf32, #tpu.memory_space<vmem>>, %arg6: memref<16x128xf32, #tpu.memory_space<vmem>>, %arg7: memref<16x128xi32, #tpu.memory_space<vmem>>) attributes {dimension_semantics = [#tpu.dimension_semantics<parallel>], iteration_bounds = array<i64: 1>, scalar_prefetch = 0 : i64, scratch_operands = 0 : i64, tpu.core_type = #tpu.core_type<tc>, window_params = [{transform_indices = @transform_0, window_bounds = array<i64: 5>}, {transform_indices = @transform_1, window_bounds = array<i64: 5>}, {transform_indices = @transform_2, window_bounds = array<i64: 5>}, {transform_indices = @transform_3, window_bounds = array<i64: 5>}, {transform_indices = @transform_4, window_bounds = array<i64: 16, 128>}, {transform_indices = @transform_5, window_bounds = array<i64: 16, 128>}, {transform_indices = @transform_6, window_bounds = array<i64: 16, 128>}]} {
    %c0 = arith.constant 0 : index
    %c0_0 = arith.constant 0 : index
    %0 = vector.load %arg5[%c0, %c0_0] : memref<16x128xf32, #tpu.memory_space<vmem>>, vector<16x128xf32>
    %c0_1 = arith.constant 0 : index
    %1 = memref.load %arg1[%c0_1] : memref<5xf32, #tpu.memory_space<smem>>
    %c1 = arith.constant 1 : index
    %2 = memref.load %arg1[%c1] : memref<5xf32, #tpu.memory_space<smem>>
    %c2 = arith.constant 2 : index
    %3 = memref.load %arg1[%c2] : memref<5xf32, #tpu.memory_space<smem>>
    %c3 = arith.constant 3 : index
    %4 = memref.load %arg1[%c3] : memref<5xf32, #tpu.memory_space<smem>>
    %c4 = arith.constant 4 : index
    %5 = memref.load %arg1[%c4] : memref<5xf32, #tpu.memory_space<smem>>
    %c0_2 = arith.constant 0 : index
    %6 = memref.load %arg2[%c0_2] : memref<5xf32, #tpu.memory_space<smem>>
    %c1_3 = arith.constant 1 : index
    %7 = memref.load %arg2[%c1_3] : memref<5xf32, #tpu.memory_space<smem>>
    %c2_4 = arith.constant 2 : index
    %8 = memref.load %arg2[%c2_4] : memref<5xf32, #tpu.memory_space<smem>>
    %c3_5 = arith.constant 3 : index
    %9 = memref.load %arg2[%c3_5] : memref<5xf32, #tpu.memory_space<smem>>
    %c4_6 = arith.constant 4 : index
    %10 = memref.load %arg2[%c4_6] : memref<5xf32, #tpu.memory_space<smem>>
    %c0_7 = arith.constant 0 : index
    %11 = memref.load %arg3[%c0_7] : memref<5xf32, #tpu.memory_space<smem>>
    %c1_8 = arith.constant 1 : index
    %12 = memref.load %arg3[%c1_8] : memref<5xf32, #tpu.memory_space<smem>>
    %c2_9 = arith.constant 2 : index
    %13 = memref.load %arg3[%c2_9] : memref<5xf32, #tpu.memory_space<smem>>
    %c3_10 = arith.constant 3 : index
    %14 = memref.load %arg3[%c3_10] : memref<5xf32, #tpu.memory_space<smem>>
    %c4_11 = arith.constant 4 : index
    %15 = memref.load %arg3[%c4_11] : memref<5xf32, #tpu.memory_space<smem>>
    %c0_12 = arith.constant 0 : index
    %16 = memref.load %arg4[%c0_12] : memref<5xf32, #tpu.memory_space<smem>>
    %c1_13 = arith.constant 1 : index
    %17 = memref.load %arg4[%c1_13] : memref<5xf32, #tpu.memory_space<smem>>
    %c2_14 = arith.constant 2 : index
    %18 = memref.load %arg4[%c2_14] : memref<5xf32, #tpu.memory_space<smem>>
    %c3_15 = arith.constant 3 : index
    %19 = memref.load %arg4[%c3_15] : memref<5xf32, #tpu.memory_space<smem>>
    %c4_16 = arith.constant 4 : index
    %20 = memref.load %arg4[%c4_16] : memref<5xf32, #tpu.memory_space<smem>>
    %21 = vector.broadcast %1 : f32 to vector<16x128xf32>
    %22 = arith.subf %0, %21 : vector<16x128xf32>
    %23 = arith.mulf %22, %22 : vector<16x128xf32>
    %24 = vector.broadcast %2 : f32 to vector<16x128xf32>
    %25 = arith.subf %0, %24 : vector<16x128xf32>
    %26 = arith.mulf %25, %25 : vector<16x128xf32>
    %27 = vector.broadcast %3 : f32 to vector<16x128xf32>
    %28 = arith.subf %0, %27 : vector<16x128xf32>
    %29 = arith.mulf %28, %28 : vector<16x128xf32>
    %30 = vector.broadcast %4 : f32 to vector<16x128xf32>
    %31 = arith.subf %0, %30 : vector<16x128xf32>
    %32 = arith.mulf %31, %31 : vector<16x128xf32>
    %33 = vector.broadcast %5 : f32 to vector<16x128xf32>
    %34 = arith.subf %0, %33 : vector<16x128xf32>
    %35 = arith.mulf %34, %34 : vector<16x128xf32>
    %36 = vector.broadcast %6 : f32 to vector<16x128xf32>
    %37 = arith.mulf %23, %36 : vector<16x128xf32>
    %38 = vector.broadcast %16 : f32 to vector<16x128xf32>
    %39 = arith.addf %37, %38 : vector<16x128xf32>
    %40 = vector.broadcast %7 : f32 to vector<16x128xf32>
    %41 = arith.mulf %26, %40 : vector<16x128xf32>
    %42 = vector.broadcast %17 : f32 to vector<16x128xf32>
    %43 = arith.addf %41, %42 : vector<16x128xf32>
    %44 = vector.broadcast %8 : f32 to vector<16x128xf32>
    %45 = arith.mulf %29, %44 : vector<16x128xf32>
    %46 = vector.broadcast %18 : f32 to vector<16x128xf32>
    %47 = arith.addf %45, %46 : vector<16x128xf32>
    %48 = vector.broadcast %9 : f32 to vector<16x128xf32>
    %49 = arith.mulf %32, %48 : vector<16x128xf32>
    %50 = vector.broadcast %19 : f32 to vector<16x128xf32>
    %51 = arith.addf %49, %50 : vector<16x128xf32>
    %52 = vector.broadcast %10 : f32 to vector<16x128xf32>
    %53 = arith.mulf %35, %52 : vector<16x128xf32>
    %54 = vector.broadcast %20 : f32 to vector<16x128xf32>
    %55 = arith.addf %53, %54 : vector<16x128xf32>
    %56 = arith.maximumf %39, %43 : vector<16x128xf32>
    %57 = arith.maximumf %56, %47 : vector<16x128xf32>
    %58 = arith.maximumf %57, %51 : vector<16x128xf32>
    %59 = arith.maximumf %58, %55 : vector<16x128xf32>
    %60 = arith.subf %39, %59 : vector<16x128xf32>
    %61 = math.exp %60 : vector<16x128xf32>
    %62 = vector.broadcast %1 : f32 to vector<16x128xf32>
    %63 = arith.mulf %61, %62 : vector<16x128xf32>
    %64 = arith.subf %43, %59 : vector<16x128xf32>
    %65 = math.exp %64 : vector<16x128xf32>
    %66 = arith.addf %61, %65 : vector<16x128xf32>
    %67 = vector.broadcast %2 : f32 to vector<16x128xf32>
    %68 = arith.mulf %65, %67 : vector<16x128xf32>
    %69 = arith.addf %63, %68 : vector<16x128xf32>
    %70 = arith.subf %47, %59 : vector<16x128xf32>
    %71 = math.exp %70 : vector<16x128xf32>
    %72 = arith.addf %66, %71 : vector<16x128xf32>
    %73 = vector.broadcast %3 : f32 to vector<16x128xf32>
    %74 = arith.mulf %71, %73 : vector<16x128xf32>
    %75 = arith.addf %69, %74 : vector<16x128xf32>
    %76 = arith.subf %51, %59 : vector<16x128xf32>
    %77 = math.exp %76 : vector<16x128xf32>
    %78 = arith.addf %72, %77 : vector<16x128xf32>
    %79 = vector.broadcast %4 : f32 to vector<16x128xf32>
    %80 = arith.mulf %77, %79 : vector<16x128xf32>
    %81 = arith.addf %75, %80 : vector<16x128xf32>
    %82 = arith.subf %55, %59 : vector<16x128xf32>
    %83 = math.exp %82 : vector<16x128xf32>
    %84 = arith.addf %78, %83 : vector<16x128xf32>
    %85 = vector.broadcast %5 : f32 to vector<16x128xf32>
    %86 = arith.mulf %83, %85 : vector<16x128xf32>
    %87 = arith.addf %81, %86 : vector<16x128xf32>
    %88 = tpu.reciprocal %84 {approx = true} : vector<16x128xf32> -> vector<16x128xf32>
    %89 = arith.mulf %87, %88 : vector<16x128xf32>
    %90 = vector.broadcast %11 : f32 to vector<16x128xf32>
    %91 = arith.mulf %23, %90 : vector<16x128xf32>
    %92 = vector.broadcast %16 : f32 to vector<16x128xf32>
    %93 = arith.addf %91, %92 : vector<16x128xf32>
    %c0_i32 = arith.constant 0 : i32
    %94 = vector.broadcast %c0_i32 : i32 to vector<16x128xi32>
    %95 = vector.broadcast %1 : f32 to vector<16x128xf32>
    %96 = vector.broadcast %12 : f32 to vector<16x128xf32>
    %97 = arith.mulf %26, %96 : vector<16x128xf32>
    %98 = vector.broadcast %17 : f32 to vector<16x128xf32>
    %99 = arith.addf %97, %98 : vector<16x128xf32>
    %100 = arith.cmpf ogt, %99, %93 : vector<16x128xf32>
    %101 = arith.select %100, %99, %93 : vector<16x128xi1>, vector<16x128xf32>
    %c1_i32 = arith.constant 1 : i32
    %102 = vector.broadcast %c1_i32 : i32 to vector<16x128xi32>
    %103 = arith.select %100, %102, %94 : vector<16x128xi1>, vector<16x128xi32>
    %104 = vector.broadcast %2 : f32 to vector<16x128xf32>
    %105 = arith.select %100, %104, %95 : vector<16x128xi1>, vector<16x128xf32>
    %106 = vector.broadcast %13 : f32 to vector<16x128xf32>
    %107 = arith.mulf %29, %106 : vector<16x128xf32>
    %108 = vector.broadcast %18 : f32 to vector<16x128xf32>
    %109 = arith.addf %107, %108 : vector<16x128xf32>
    %110 = arith.cmpf ogt, %109, %101 : vector<16x128xf32>
    %111 = arith.select %110, %109, %101 : vector<16x128xi1>, vector<16x128xf32>
    %c2_i32 = arith.constant 2 : i32
    %112 = vector.broadcast %c2_i32 : i32 to vector<16x128xi32>
    %113 = arith.select %110, %112, %103 : vector<16x128xi1>, vector<16x128xi32>
    %114 = vector.broadcast %3 : f32 to vector<16x128xf32>
    %115 = arith.select %110, %114, %105 : vector<16x128xi1>, vector<16x128xf32>
    %116 = vector.broadcast %14 : f32 to vector<16x128xf32>
    %117 = arith.mulf %32, %116 : vector<16x128xf32>
    %118 = vector.broadcast %19 : f32 to vector<16x128xf32>
    %119 = arith.addf %117, %118 : vector<16x128xf32>
    %120 = arith.cmpf ogt, %119, %111 : vector<16x128xf32>
    %121 = arith.select %120, %119, %111 : vector<16x128xi1>, vector<16x128xf32>
    %c3_i32 = arith.constant 3 : i32
    %122 = vector.broadcast %c3_i32 : i32 to vector<16x128xi32>
    %123 = arith.select %120, %122, %113 : vector<16x128xi1>, vector<16x128xi32>
    %124 = vector.broadcast %4 : f32 to vector<16x128xf32>
    %125 = arith.select %120, %124, %115 : vector<16x128xi1>, vector<16x128xf32>
    %126 = vector.broadcast %15 : f32 to vector<16x128xf32>
    %127 = arith.mulf %35, %126 : vector<16x128xf32>
    %128 = vector.broadcast %20 : f32 to vector<16x128xf32>
    %129 = arith.addf %127, %128 : vector<16x128xf32>
    %130 = arith.cmpf ogt, %129, %121 : vector<16x128xf32>
    %c4_i32 = arith.constant 4 : i32
    %131 = vector.broadcast %c4_i32 : i32 to vector<16x128xi32>
    %132 = arith.select %130, %131, %123 : vector<16x128xi1>, vector<16x128xi32>
    %133 = vector.broadcast %5 : f32 to vector<16x128xf32>
    %134 = arith.select %130, %133, %125 : vector<16x128xi1>, vector<16x128xf32>
    %135 = arith.subf %134, %89 : vector<16x128xf32>
    %136 = arith.addf %89, %135 : vector<16x128xf32>
    %c0_17 = arith.constant 0 : index
    %c0_18 = arith.constant 0 : index
    %137 = vector.load %arg6[%c0_17, %c0_18] : memref<16x128xf32, #tpu.memory_space<vmem>>, vector<16x128xf32>
    tpu.vector_store %arg6[%c0_17, %c0_18], %136 {strides = array<i32>} : memref<16x128xf32, #tpu.memory_space<vmem>>, vector<16x128xf32>,
    %c0_19 = arith.constant 0 : index
    %c0_20 = arith.constant 0 : index
    %138 = vector.load %arg7[%c0_19, %c0_20] : memref<16x128xi32, #tpu.memory_space<vmem>>, vector<16x128xi32>
    tpu.vector_store %arg7[%c0_19, %c0_20], %132 {strides = array<i32>} : memref<16x128xi32, #tpu.memory_space<vmem>>, vector<16x128xi32>,
    return
  }
  func.func @transform_0(%arg0: i32) -> i32 {
    %c0_i32 = arith.constant 0 : i32
    %c0_i32_0 = arith.constant 0 : i32
    return %c0_i32 : i32
  }
  func.func @transform_1(%arg0: i32) -> i32 {
    %c0_i32 = arith.constant 0 : i32
    %c0_i32_0 = arith.constant 0 : i32
    return %c0_i32 : i32
  }
  func.func @transform_2(%arg0: i32) -> i32 {
    %c0_i32 = arith.constant 0 : i32
    %c0_i32_0 = arith.constant 0 : i32
    return %c0_i32 : i32
  }
  func.func @transform_3(%arg0: i32) -> i32 {
    %c0_i32 = arith.constant 0 : i32
    %c0_i32_0 = arith.constant 0 : i32
    return %c0_i32 : i32
  }
  func.func @transform_4(%arg0: i32) -> (i32, i32) {
    %c0_i32 = arith.constant 0 : i32
    %c0_i32_0 = arith.constant 0 : i32
    return %arg0, %c0_i32 : i32, i32
  }
  func.func @transform_5(%arg0: i32) -> (i32, i32) {
    %c0_i32 = arith.constant 0 : i32
    %c0_i32_0 = arith.constant 0 : i32
    return %arg0, %c0_i32 : i32, i32
  }
  func.func @transform_6(%arg0: i32) -> (i32, i32) {
    %c0_i32 = arith.constant 0 : i32
    %c0_i32_0 = arith.constant 0 : i32
    return %arg0, %c0_i32 : i32, i32
  }
}

</mosaic_0001>

<llo_original>
// kernel: tpu_custom_call.1
$region0: #{tpu_custom_call.1}
  #allocation0 [shape = 'u32[]', space=smem, size = 0x4, offset = 0x4, fixed_abs, tag = 'smem constant byte address 0x4 - core index']
  #allocation1 [shape = 'u32[144,128]{1,0:T(1,128)}', space=vmem, size = 0x12000, scoped, tag = 'internal scratch']
  %s0 = inlined_call_operand.hbm [shape: f32[5], index: 0, kind: input, shape index: {}]
  %s1 = inlined_call_operand.vmem [shape: f32[5], index: 1, kind: input, shape index: {}]
  %s2 = inlined_call_operand.vmem [shape: f32[5], index: 2, kind: input, shape index: {}]
  %s3 = inlined_call_operand.vmem [shape: f32[5], index: 3, kind: input, shape index: {}]
  %s4 = inlined_call_operand.hbm [shape: f32[16,128], index: 4, kind: input, shape index: {}]
  %s5 = inlined_call_operand.hbm [shape: f32[16,128], index: 5, kind: output, shape index: {0}]
  %s6 = inlined_call_operand.hbm [shape: s32[16,128], index: 6, kind: output, shape index: {1}]
  %7 = xla_tuple %s5, %s6
  %s8 = sld [smem:[#allocation0]]
  $region58: #{tpu_custom_call.1} parent=0
    _
  %s10 = ssub.s32 1, %s8
  %s11 = scalar_select 0, %s10, %s8
  $region1: #{tpu_custom_call.1} parent=0
    #allocation2 [shape = 'u8[512]{0}', space=smem, size = 0x200, scoped, tag = 'input window, operand 0, single buffered']
    #allocation3 [shape = 's32[1]{0}', space=sflag, size = 0x4, scoped, tag = 'scoped memory for tpu_custom_call.1']
    #allocation4 [shape = 's32[1]{0}', space=sflag, size = 0x4, scoped, tag = 'scoped memory for tpu_custom_call.1']
    #allocation5 [shape = 's32[1]{0}', space=sflag, size = 0x4, scoped, tag = 'scoped memory for tpu_custom_call.1']
    #allocation6 [shape = 's32[1]{0}', space=sflag, size = 0x4, scoped, tag = 'scoped memory for tpu_custom_call.1']
    #allocation7 [shape = 'u8[512]{0}', space=smem, size = 0x200, scoped, tag = 'input window, operand 1, single buffered']
    #allocation8 [shape = 'u8[512]{0}', space=smem, size = 0x200, scoped, tag = 'input window, operand 2, single buffered']
    #allocation9 [shape = 's32[1]{0}', space=sflag, size = 0x4, scoped, tag = 'scoped memory for tpu_custom_call.1']
    #allocation10 [shape = 'u8[512]{0}', space=smem, size = 0x200, scoped, tag = 'input window, operand 3, single buffered']
    #allocation11 [shape = 'u8[8192]{0}', space=vmem, size = 0x2000, scoped, tag = 'input window, operand 4, single buffered']
    #allocation12 [shape = 'u8[8192]{0}', space=vmem, size = 0x2000, scoped, tag = 'output window, operand 0, single buffered']
    #allocation13 [shape = 'u8[8192]{0}', space=vmem, size = 0x2000, scoped, tag = 'output window, operand 1, single buffered']
    #allocation14 [shape = 's32[1]{0}', space=sflag, size = 0x4, scoped, tag = 'scoped memory for tpu_custom_call.1']
    %12 = vsyncpa [#allocation5], 0
    %13 = vsyncpa [#allocation6], 0
    %14 = vsyncpa [#allocation9], 0
    %15 = vsyncpa [#allocation3], 0
    %16 = vsyncpa [#allocation4], 0
    %17 = vsyncpa [#allocation14], 0
    // Predicated region
    $region2: #{tpu_custom_call.1} parent=1 // pred_check
      _
    $region3: #{tpu_custom_call.1} parent=1 // pred_check_branch
      %19 = sbr.rel (0) target = $region5
    $region4: #{tpu_custom_call.1} parent=1 // pred_region
      %s21 = ssub.s32 16, 16
      %22 = vsyncadd [#allocation5], %s21
      %25 = dma.hbm_to_smem %s0, 16, [#allocation2], [#allocation5]
    $region5: #{tpu_custom_call.1} parent=1 // pred_fallthru
      _
    // Predicated region
    $region6: #{tpu_custom_call.1} parent=1 // pred_check
      _
    $region7: #{tpu_custom_call.1} parent=1 // pred_check_branch
      %27 = sbr.rel (0) target = $region9
    $region8: #{tpu_custom_call.1} parent=1 // pred_region
      %s29 = ssub.s32 16, 16
      %30 = vsyncadd [#allocation6], %s29
      %s32 = sshll.u32 %s1, 4
      %s33 = int_to_ptr.vmem [resolvable:$true] %s32
      %35 = dma.vmem_to_smem %s33, 16, [#allocation7], [#allocation6]
    $region9: #{tpu_custom_call.1} parent=1 // pred_fallthru
      _
    // Predicated region
    $region10: #{tpu_custom_call.1} parent=1 // pred_check
      _
    $region11: #{tpu_custom_call.1} parent=1 // pred_check_branch
      %37 = sbr.rel (0) target = $region13
    $region12: #{tpu_custom_call.1} parent=1 // pred_region
      %s39 = ssub.s32 16, 16
      %40 = vsyncadd [#allocation9], %s39
      %s42 = sshll.u32 %s2, 4
      %s43 = int_to_ptr.vmem [resolvable:$true] %s42
      %45 = dma.vmem_to_smem %s43, 16, [#allocation8], [#allocation9]
    $region13: #{tpu_custom_call.1} parent=1 // pred_fallthru
      _
    // Predicated region
    $region14: #{tpu_custom_call.1} parent=1 // pred_check
      _
    $region15: #{tpu_custom_call.1} parent=1 // pred_check_branch
      %47 = sbr.rel (0) target = $region17
    $region16: #{tpu_custom_call.1} parent=1 // pred_region
      %s49 = ssub.s32 16, 16
      %50 = vsyncadd [#allocation9], %s49
      %s52 = sshll.u32 %s3, 4
      %s53 = int_to_ptr.vmem [resolvable:$true] %s52
      %55 = dma.vmem_to_smem %s53, 16, [#allocation10], [#allocation9]
    $region17: #{tpu_custom_call.1} parent=1 // pred_fallthru
      _
    // Predicated region
    $region18: #{tpu_custom_call.1} parent=1 // pred_check
      _
    $region19: #{tpu_custom_call.1} parent=1 // pred_check_branch
      %57 = sbr.rel (0) target = $region21
    $region20: #{tpu_custom_call.1} parent=1 // pred_region
      %s59 = ssub.s32 256, 256
      %60 = vsyncadd [#allocation3], %s59
      %s61 = sshll.u32 [#allocation11], 4
      %s62 = int_to_ptr.vmem [resolvable:$true] %s61
      %67 = dma.hbm_to_vmem [thread:$0]  %s4, 256, %s62, [#allocation3], 128, 128, 8
    $region21: #{tpu_custom_call.1} parent=1 // pred_fallthru
      _
    // Predicated region
    $region22: #{tpu_custom_call.1} parent=1 // pred_check
      _
    $region23: #{tpu_custom_call.1} parent=1 // pred_check_branch
      %69 = sbr.rel (0) target = $region25
    $region24: #{tpu_custom_call.1} parent=1 // pred_region
      %70 = dma.done [#allocation5], 16
    $region25: #{tpu_custom_call.1} parent=1 // pred_fallthru
      _
    // Predicated region
    $region26: #{tpu_custom_call.1} parent=1 // pred_check
      _
    $region27: #{tpu_custom_call.1} parent=1 // pred_check_branch
      %72 = sbr.rel (0) target = $region29
    $region28: #{tpu_custom_call.1} parent=1 // pred_region
      %73 = dma.done [#allocation6], 16
    $region29: #{tpu_custom_call.1} parent=1 // pred_fallthru
      _
    // Predicated region
    $region30: #{tpu_custom_call.1} parent=1 // pred_check
      _
    $region31: #{tpu_custom_call.1} parent=1 // pred_check_branch
      %75 = sbr.rel (0) target = $region33
    $region32: #{tpu_custom_call.1} parent=1 // pred_region
      %76 = dma.done [#allocation9], 16
    $region33: #{tpu_custom_call.1} parent=1 // pred_fallthru
      _
    // Predicated region
    $region34: #{tpu_custom_call.1} parent=1 // pred_check
      _
    $region35: #{tpu_custom_call.1} parent=1 // pred_check_branch
      %78 = sbr.rel (0) target = $region37
    $region36: #{tpu_custom_call.1} parent=1 // pred_region
      %79 = dma.done [#allocation9], 16
    $region37: #{tpu_custom_call.1} parent=1 // pred_fallthru
      _
    // Predicated region
    $region38: #{tpu_custom_call.1} parent=1 // pred_check
      _
    $region39: #{tpu_custom_call.1} parent=1 // pred_check_branch
      %81 = sbr.rel (0) target = $region41
    $region40: #{tpu_custom_call.1} parent=1 // pred_region
      %82 = dma.done [#allocation3], 256
    $region41: #{tpu_custom_call.1} parent=1 // pred_fallthru
      _
    %83 = sfence
    %v84 = vld [vmem:[#allocation11] sm:$0xff]
    %v85 = vld [vmem:[#allocation11 + $0x8] sm:$0xff]
    %s86 = sld [smem:[#allocation2]]
    %s87 = sld [smem:[#allocation2 + $0x1]]
    %s88 = sld [smem:[#allocation2 + $0x2]]
    %s89 = sld [smem:[#allocation2 + $0x3]]
    %s90 = sld [smem:[#allocation2 + $0x4]]
    %s91 = sld [smem:[#allocation7]]
    %s92 = sld [smem:[#allocation7 + $0x1]]
    %s93 = sld [smem:[#allocation7 + $0x2]]
    %s94 = sld [smem:[#allocation7 + $0x3]]
    %s95 = sld [smem:[#allocation7 + $0x4]]
    %s96 = sld [smem:[#allocation8]]
    %s97 = sld [smem:[#allocation8 + $0x1]]
    %s98 = sld [smem:[#allocation8 + $0x2]]
    %s99 = sld [smem:[#allocation8 + $0x3]]
    %s100 = sld [smem:[#allocation8 + $0x4]]
    %s101 = sld [smem:[#allocation10]]
    %s102 = sld [smem:[#allocation10 + $0x1]]
    %s103 = sld [smem:[#allocation10 + $0x2]]
    %s104 = sld [smem:[#allocation10 + $0x3]]
    %s105 = sld [smem:[#allocation10 + $0x4]]
    %v106 = vstv %s86
    %v107 = vsub.f32 %v84, %v106
    %v108 = vsub.f32 %v85, %v106
    %v109 = vmul.f32 %v107, %v107
    %v110 = vmul.f32 %v108, %v108
    %v111 = vstv %s87
    %v112 = vsub.f32 %v84, %v111
    %v113 = vsub.f32 %v85, %v111
    %v114 = vmul.f32 %v112, %v112
    %v115 = vmul.f32 %v113, %v113
    %v116 = vstv %s88
    %v117 = vsub.f32 %v84, %v116
    %v118 = vsub.f32 %v85, %v116
    %v119 = vmul.f32 %v117, %v117
    %v120 = vmul.f32 %v118, %v118
    %v121 = vstv %s89
    %v122 = vsub.f32 %v84, %v121
    %v123 = vsub.f32 %v85, %v121
    %v124 = vmul.f32 %v122, %v122
    %v125 = vmul.f32 %v123, %v123
    %v126 = vstv %s90
    %v127 = vsub.f32 %v84, %v126
    %v128 = vsub.f32 %v85, %v126
    %v129 = vmul.f32 %v127, %v127
    %v130 = vmul.f32 %v128, %v128
    %v131 = vstv %s91
    %v132 = vmul.f32 %v109, %v131
    %v133 = vmul.f32 %v110, %v131
    %v134 = vstv %s101
    %v135 = vadd.f32 %v132, %v134
    %v136 = vadd.f32 %v133, %v134
    %v137 = vstv %s92
    %v138 = vmul.f32 %v114, %v137
    %v139 = vmul.f32 %v115, %v137
    %v140 = vstv %s102
    %v141 = vadd.f32 %v138, %v140
    %v142 = vadd.f32 %v139, %v140
    %v143 = vstv %s93
    %v144 = vmul.f32 %v119, %v143
    %v145 = vmul.f32 %v120, %v143
    %v146 = vstv %s103
    %v147 = vadd.f32 %v144, %v146
    %v148 = vadd.f32 %v145, %v146
    %v149 = vstv %s94
    %v150 = vmul.f32 %v124, %v149
    %v151 = vmul.f32 %v125, %v149
    %v152 = vstv %s104
    %v153 = vadd.f32 %v150, %v152
    %v154 = vadd.f32 %v151, %v152
    %v155 = vstv %s95
    %v156 = vmul.f32 %v129, %v155
    %v157 = vmul.f32 %v130, %v155
    %v158 = vstv %s105
    %v159 = vadd.f32 %v156, %v158
    %v160 = vadd.f32 %v157, %v158
    %v161 = vmax.f32 %v135, %v141
    %v162 = vmax.f32 %v136, %v142
    %v163 = vmax.f32 %v161, %v147
    %v164 = vmax.f32 %v162, %v148
    %v165 = vmax.f32 %v163, %v153
    %v166 = vmax.f32 %v164, %v154
    %v167 = vmax.f32 %v165, %v159
    %v168 = vmax.f32 %v166, %v160
    %v169 = vsub.f32 %v135, %v167
    %v170 = vsub.f32 %v136, %v168
    %v171 = vmul.f32 %v169, 1.442695
    %v172 = vpow.pop %v171
    %v173 = vmul.f32 %v170, 1.442695
    %v174 = vpow.pop %v173
    %v175 = vmul.f32 %v172, %v106
    %v176 = vmul.f32 %v174, %v106
    %v177 = vsub.f32 %v141, %v167
    %v178 = vsub.f32 %v142, %v168
    %v179 = vmul.f32 %v177, 1.442695
    %v180 = vpow.pop %v179
    %v181 = vmul.f32 %v178, 1.442695
    %v182 = vpow.pop %v181
    %v183 = vadd.f32 %v172, %v180
    %v184 = vadd.f32 %v174, %v182
    %v185 = vmul.f32 %v180, %v111
    %v186 = vmul.f32 %v182, %v111
    %v187 = vadd.f32 %v175, %v185
    %v188 = vadd.f32 %v176, %v186
    %v189 = vsub.f32 %v147, %v167
    %v190 = vsub.f32 %v148, %v168
    %v191 = vmul.f32 %v189, 1.442695
    %v192 = vpow.pop %v191
    %v193 = vmul.f32 %v190, 1.442695
    %v194 = vpow.pop %v193
    %v195 = vadd.f32 %v183, %v192
    %v196 = vadd.f32 %v184, %v194
    %v197 = vmul.f32 %v192, %v116
    %v198 = vmul.f32 %v194, %v116
    %v199 = vadd.f32 %v187, %v197
    %v200 = vadd.f32 %v188, %v198
    %v201 = vsub.f32 %v153, %v167
    %v202 = vsub.f32 %v154, %v168
    %v203 = vmul.f32 %v201, 1.442695
    %v204 = vpow.pop %v203
    %v205 = vmul.f32 %v202, 1.442695
    %v206 = vpow.pop %v205
    %v207 = vadd.f32 %v195, %v204
    %v208 = vadd.f32 %v196, %v206
    %v209 = vmul.f32 %v204, %v121
    %v210 = vmul.f32 %v206, %v121
    %v211 = vadd.f32 %v199, %v209
    %v212 = vadd.f32 %v200, %v210
    %v213 = vsub.f32 %v159, %v167
    %v214 = vsub.f32 %v160, %v168
    %v215 = vmul.f32 %v213, 1.442695
    %v216 = vpow.pop %v215
    %v217 = vmul.f32 %v214, 1.442695
    %v218 = vpow.pop %v217
    %v219 = vadd.f32 %v207, %v216
    %v220 = vadd.f32 %v208, %v218
    %v221 = vmul.f32 %v216, %v126
    %v222 = vmul.f32 %v218, %v126
    %v223 = vadd.f32 %v211, %v221
    %v224 = vadd.f32 %v212, %v222
    %v225 = vrcp.pop %v219
    %v226 = vrcp.pop %v220
    %v227 = vmul.f32 %v223, %v225
    %v228 = vmul.f32 %v224, %v226
    %v229 = vstv %s96
    %v230 = vmul.f32 %v109, %v229
    %v231 = vmul.f32 %v110, %v229
    %v232 = vadd.f32 %v230, %v134
    %v233 = vadd.f32 %v231, %v134
    %v234 = vstv %s97
    %v235 = vmul.f32 %v114, %v234
    %v236 = vmul.f32 %v115, %v234
    %v237 = vadd.f32 %v235, %v140
    %v238 = vadd.f32 %v236, %v140
    %vm239 = vcmp.gt.f32.partialorder %v237, %v232
    %vm240 = vcmp.gt.f32.partialorder %v238, %v233
    %v241 = vsel %vm239, %v237, %v232
    %v242 = vsel %vm240, %v238, %v233
    %v243 = vsel %vm239, 1, 0
    %v244 = vsel %vm240, 1, 0
    %v245 = vsel %vm239, %v111, %v106
    %v246 = vsel %vm240, %v111, %v106
    %v247 = vstv %s98
    %v248 = vmul.f32 %v119, %v247
    %v249 = vmul.f32 %v120, %v247
    %v250 = vadd.f32 %v248, %v146
    %v251 = vadd.f32 %v249, %v146
    %vm252 = vcmp.gt.f32.partialorder %v250, %v241
    %vm253 = vcmp.gt.f32.partialorder %v251, %v242
    %v254 = vsel %vm252, %v250, %v241
    %v255 = vsel %vm253, %v251, %v242
    %v256 = vsel %vm252, 2, %v243
    %v257 = vsel %vm253, 2, %v244
    %v258 = vsel %vm252, %v116, %v245
    %v259 = vsel %vm253, %v116, %v246
    %v260 = vstv %s99
    %v261 = vmul.f32 %v124, %v260
    %v262 = vmul.f32 %v125, %v260
    %v263 = vadd.f32 %v261, %v152
    %v264 = vadd.f32 %v262, %v152
    %vm265 = vcmp.gt.f32.partialorder %v263, %v254
    %vm266 = vcmp.gt.f32.partialorder %v264, %v255
    %v267 = vsel %vm265, %v263, %v254
    %v268 = vsel %vm266, %v264, %v255
    %v269 = vsel %vm265, 3, %v256
    %v270 = vsel %vm266, 3, %v257
    %v271 = vsel %vm265, %v121, %v258
    %v272 = vsel %vm266, %v121, %v259
    %v273 = vstv %s100
    %v274 = vmul.f32 %v129, %v273
    %v275 = vmul.f32 %v130, %v273
    %v276 = vadd.f32 %v274, %v158
    %v277 = vadd.f32 %v275, %v158
    %vm278 = vcmp.gt.f32.partialorder %v276, %v267
    %vm279 = vcmp.gt.f32.partialorder %v277, %v268
    %v280 = vsel %vm278, 4, %v269
    %v281 = vsel %vm279, 4, %v270
    %v282 = vsel %vm278, %v126, %v271
    %v283 = vsel %vm279, %v126, %v272
    %v284 = vsub.f32 %v282, %v227
    %v285 = vsub.f32 %v283, %v228
    %v286 = vadd.f32 %v227, %v284
    %v287 = vadd.f32 %v228, %v285
    %288 = vst [vmem:[#allocation12] sm:$0xff] %v286
    %289 = vst [vmem:[#allocation12 + $0x8] sm:$0xff] %v287
    %290 = vst [vmem:[#allocation13] sm:$0xff] %v280
    %291 = vst [vmem:[#allocation13 + $0x8] sm:$0xff] %v281
    // Predicated region
    $region42: #{tpu_custom_call.1} parent=1 // pred_check
      _
    $region43: #{tpu_custom_call.1} parent=1 // pred_check_branch
      %293 = sbr.rel (0) target = $region45
    $region44: #{tpu_custom_call.1} parent=1 // pred_region
      %s295 = ssub.s32 256, 256
      %296 = vsyncadd [#allocation4], %s295
      %s297 = sshll.u32 [#allocation12], 4
      %s298 = int_to_ptr.vmem [resolvable:$true] %s297
      %303 = dma.vmem_to_hbm [thread:$0]  %s298, 256, %s5, [#allocation4], 128, 128, 8
    $region45: #{tpu_custom_call.1} parent=1 // pred_fallthru
      _
    // Predicated region
    $region46: #{tpu_custom_call.1} parent=1 // pred_check
      _
    $region47: #{tpu_custom_call.1} parent=1 // pred_check_branch
      %305 = sbr.rel (0) target = $region49
    $region48: #{tpu_custom_call.1} parent=1 // pred_region
      %s307 = ssub.s32 256, 256
      %308 = vsyncadd [#allocation14], %s307
      %s309 = sshll.u32 [#allocation13], 4
      %s310 = int_to_ptr.vmem [resolvable:$true] %s309
      %315 = dma.vmem_to_hbm [thread:$0]  %s310, 256, %s6, [#allocation14], 128, 128, 8
    $region49: #{tpu_custom_call.1} parent=1 // pred_fallthru
      _
    // Predicated region
    $region50: #{tpu_custom_call.1} parent=1 // pred_check
      _
    $region51: #{tpu_custom_call.1} parent=1 // pred_check_branch
      %317 = sbr.rel (0) target = $region53
    $region52: #{tpu_custom_call.1} parent=1 // pred_region
      %318 = dma.done [#allocation4], 256
    $region53: #{tpu_custom_call.1} parent=1 // pred_fallthru
      _
    // Predicated region
    $region54: #{tpu_custom_call.1} parent=1 // pred_check
      _
    $region55: #{tpu_custom_call.1} parent=1 // pred_check_branch
      %320 = sbr.rel (0) target = $region57
    $region56: #{tpu_custom_call.1} parent=1 // pred_region
      %321 = dma.done [#allocation14], 256
    $region57: #{tpu_custom_call.1} parent=1 // pred_fallthru
      _
    %322 = vsyncpa [#allocation3], 1
    %323 = vsyncpa [#allocation4], 1
    %324 = vsyncpa [#allocation14], 1
    %325 = vsyncpa [#allocation5], 1
    %326 = vsyncpa [#allocation6], 1
    %327 = vsyncpa [#allocation9], 1

</llo_original>
